<compile_context>
chip_gen: v7x
topology: tpu7x:2x2x1
jax: 0.10.0
libtpu: 0.0.40
codegen_flags: <defaults>
</compile_context>

<pallas_src>
import functools
import numpy as np

import jax
import jax.numpy as jnp
from jax.experimental import pallas as pl
from jax.experimental.pallas import tpu as pltpu

_EPS = 1e-12  # torch F.normalize default eps


# --------------------------------------------------------------------------
# Kernels
# --------------------------------------------------------------------------
def _l2norm_kernel_3d(x_ref, o_ref):
    """Block (t_n, C, t_hw): normalize each (n, hw) column over C (axis 1)."""
    xf = x_ref[...].astype(jnp.float32)
    sumsq = jnp.sum(xf * xf, axis=1, keepdims=True)          # (t_n, 1, t_hw)
    scale = jax.lax.rsqrt(jnp.maximum(sumsq, jnp.float32(_EPS * _EPS)))
    o_ref[...] = (xf * scale).astype(o_ref.dtype)


def _l2norm_kernel_2d(x_ref, o_ref):
    """Block (t_n, C): normalize each row over the lane axis (axis -1)."""
    xf = x_ref[...].astype(jnp.float32)
    sumsq = jnp.sum(xf * xf, axis=-1, keepdims=True)          # (t_n, 1)
    scale = jax.lax.rsqrt(jnp.maximum(sumsq, jnp.float32(_EPS * _EPS)))
    o_ref[...] = (xf * scale).astype(o_ref.dtype)


def _sumsq_kernel(x_ref, ssq_ref, *, c_total, t_c):
    """Large-C pass 1: accumulate sum(x^2) over C tiles into (t_n,1,t_hw)."""
    k = pl.program_id(2)

    @pl.when(k == 0)
    def _():
        ssq_ref[...] = jnp.zeros_like(ssq_ref)

    xf = x_ref[...].astype(jnp.float32)
    # Mask the ragged final C tile (out-of-bounds sublanes hold garbage).
    c_ids = jax.lax.broadcasted_iota(jnp.int32, xf.shape, 1) + k * t_c
    xf = jnp.where(c_ids < c_total, xf, 0.0)
    ssq_ref[...] += jnp.sum(xf * xf, axis=1, keepdims=True)


def _scale_kernel(x_ref, ssq_ref, o_ref):
    """Large-C pass 2: o = x * rsqrt(max(sumsq, eps^2)), elementwise."""
    xf = x_ref[...].astype(jnp.float32)
    scale = jax.lax.rsqrt(jnp.maximum(ssq_ref[...], jnp.float32(_EPS * _EPS)))
    o_ref[...] = (xf * scale).astype(o_ref.dtype)


# --------------------------------------------------------------------------
# Sizing helpers
# --------------------------------------------------------------------------
def _vmem_config():
    """Return (target input-block bytes, scoped-VMEM budget bytes)."""
    vmem_cap = 64 * 1024 * 1024            # conservative default (v7x per-TC)
    try:
        info = pltpu.get_tpu_info()
        cap = int(getattr(info, "vmem_capacity_bytes", 0))
        if cap > 0:
            vmem_cap = cap
    except Exception:
        pass
    budget = (vmem_cap * 3) // 4           # keep headroom vs. physical VMEM
    # ~4 MiB blocks on 64 MiB-VMEM chips (v7x), ~8 MiB on 128 MiB (v5e/v6e).
    target = 4 * 1024 * 1024 if vmem_cap <= 64 * 1024 * 1024 else 8 * 1024 * 1024
    return target, budget


def _per_elem_bytes(itemsize):
    # in + out blocks, double-buffered, native dtype  +  two f32 temps
    return 4 * itemsize + 8


def _vmem_limit_bytes(block_elems, itemsize, budget):
    need = block_elems * _per_elem_bytes(itemsize) + 2 * 1024 * 1024
    return int(min(budget, max(32 * 1024 * 1024, need)))


# --------------------------------------------------------------------------
# pallas_call wrappers (one per layout path)
# --------------------------------------------------------------------------
def _normalize_3d(x3d, block_elems, vmem_budget, itemsize):
    """Single-pass path: x3d is (N, C, HW); full C per block; tile N and HW."""
    N, C, HW = x3d.shape
    if C * HW <= block_elems:
        t_hw = HW                                   # fully contiguous DMA per n
        t_n = min(N, max(1, block_elems // (C * HW)))
    else:
        t_n = 1
        t_hw = max(128, ((block_elems // C) // 128) * 128)
        if t_hw >= HW:
            t_hw = HW
    # v7x megacore: avoid a single-step grid when N can be split (cheap here
    # because the whole tensor fits in one block anyway).
    if t_n >= N and t_hw >= HW and N > 1:
        t_n = pl.cdiv(N, 2)
    grid = (pl.cdiv(N, t_n), pl.cdiv(HW, t_hw))
    vmem_limit = _vmem_limit_bytes(t_n * C * t_hw, itemsize, vmem_budget)
    # TODO(synk): 1 < HW < 128 keeps a narrow lane axis (masked stores); a
    # relayout-based variant could restore lane density for those shapes.
    return pl.pallas_call(
        _l2norm_kernel_3d,
        out_shape=jax.ShapeDtypeStruct((N, C, HW), x3d.dtype),
        grid=grid,
        in_specs=[pl.BlockSpec((t_n, C, t_hw), lambda n, j: (n, 0, j))],
        out_specs=pl.BlockSpec((t_n, C, t_hw), lambda n, j: (n, 0, j)),
        compiler_params=pltpu.CompilerParams(
            dimension_semantics=("parallel", "parallel"),
            vmem_limit_bytes=vmem_limit,
        ),
    )(x3d)


def _normalize_2d(x2d, block_elems, vmem_budget, itemsize):
    """Lane-dense path for normalizing the trailing axis: x2d is (N, C)."""
    N, C = x2d.shape
    t_n = max(1, block_elems // C)
    if t_n >= N or N <= 8:
        t_n = N                                     # full extent is always legal
    else:
        t_n = max(8, (t_n // 8) * 8)                # sublane dim: multiple of 8
    # v7x megacore: split a single-step grid when N allows a legal split.
    if t_n >= N and N > 8:
        t_n = max(8, ((pl.cdiv(N, 2) + 7) // 8) * 8)
    grid = (pl.cdiv(N, t_n),)
    vmem_limit = _vmem_limit_bytes(t_n * C, itemsize, vmem_budget)
    return pl.pallas_call(
        _l2norm_kernel_2d,
        out_shape=jax.ShapeDtypeStruct((N, C), x2d.dtype),
        grid=grid,
        in_specs=[pl.BlockSpec((t_n, C), lambda i: (i, 0))],
        out_specs=pl.BlockSpec((t_n, C), lambda i: (i, 0)),
        compiler_params=pltpu.CompilerParams(
            dimension_semantics=("parallel",),
            vmem_limit_bytes=vmem_limit,
        ),
    )(x2d)


def _normalize_two_pass(x3d, block_elems, vmem_budget, itemsize):
    """Large-C fallback: the full C extent does not fit in one VMEM block.
    Pass 1 accumulates sum(x^2) over C tiles into an (N, 1, HW) f32 buffer;
    pass 2 rescales.  Reads x from HBM twice but keeps every block a few MiB.
    """
    N, C, HW = x3d.shape
    t_hw = HW if HW <= 512 else 512                 # multiple of 128 or full
    t_c = max(8, ((block_elems // max(t_hw, 1)) // 8) * 8)
    if t_c >= C:
        t_c = C
    t_n = 1
    grid = (N, pl.cdiv(HW, t_hw), pl.cdiv(C, t_c))
    vmem_limit = _vmem_limit_bytes(t_n * t_c * t_hw, itemsize, vmem_budget)

    sumsq = pl.pallas_call(
        functools.partial(_sumsq_kernel, c_total=C, t_c=t_c),
        out_shape=jax.ShapeDtypeStruct((N, 1, HW), jnp.float32),
        grid=grid,
        in_specs=[pl.BlockSpec((t_n, t_c, t_hw), lambda n, j, k: (n, k, j))],
        out_specs=pl.BlockSpec((t_n, 1, t_hw), lambda n, j, k: (n, 0, j)),
        compiler_params=pltpu.CompilerParams(
            dimension_semantics=("parallel", "parallel", "arbitrary"),
            vmem_limit_bytes=vmem_limit,
        ),
    )(x3d)

    return pl.pallas_call(
        _scale_kernel,
        out_shape=jax.ShapeDtypeStruct((N, C, HW), x3d.dtype),
        grid=grid,
        in_specs=[pl.BlockSpec((t_n, t_c, t_hw), lambda n, j, k: (n, k, j)),
                  pl.BlockSpec((t_n, 1, t_hw), lambda n, j, k: (n, 0, j))],
        out_specs=pl.BlockSpec((t_n, t_c, t_hw), lambda n, j, k: (n, k, j)),
        compiler_params=pltpu.CompilerParams(
            dimension_semantics=("parallel", "parallel", "parallel"),
            vmem_limit_bytes=vmem_limit,
        ),
    )(x3d, sumsq)


# --------------------------------------------------------------------------
# Public entry point (VectorNorm.forward)
# --------------------------------------------------------------------------
@functools.partial(jax.jit, static_argnames=("dim", "p", "_force_two_pass",
                                              "_max_block_elems"))
def vector_norm(x, dim=1, p=2, *, _force_two_pass=False, _max_block_elems=None):
    """Pallas implementation of VectorNorm.forward == F.normalize(x, dim, p=2)."""
    if p != 2:
        # TODO(synk): only p=2 (Euclidean) normalization is implemented.
        raise NotImplementedError("Only p=2 is supported.")

    ndim = x.ndim
    dim = dim % ndim
    shape = x.shape

    N = int(np.prod(shape[:dim])) if dim > 0 else 1
    C = int(shape[dim])
    HW = int(np.prod(shape[dim + 1:])) if dim + 1 < ndim else 1

    itemsize = jnp.dtype(x.dtype).itemsize
    target_bytes, vmem_budget = _vmem_config()

    headroom = 2 * 1024 * 1024
    per_elem = _per_elem_bytes(itemsize)
    elems_budget = max(1024, (vmem_budget - headroom) // per_elem)
    block_elems = min(max(1024, target_bytes // itemsize), elems_budget)
    if _max_block_elems is not None:                # test hook only
        block_elems = min(block_elems, int(_max_block_elems))

    if _force_two_pass:
        out = _normalize_two_pass(x.reshape(N, C, HW), block_elems,
                                  vmem_budget, itemsize)
    elif HW == 1:
        if min(N, 8) * C <= elems_budget:
            out = _normalize_2d(x.reshape(N, C), block_elems,
                                vmem_budget, itemsize).reshape(N, C, 1)
        else:
            # TODO(synk): a lane-tiled 2-D two-pass would keep lanes dense for
            # huge trailing-dim C; the generic fallback below is correct.
            out = _normalize_two_pass(x.reshape(N, C, 1), block_elems,
                                      vmem_budget, itemsize)
    else:
        if C * min(HW, 128) <= elems_budget:
            out = _normalize_3d(x.reshape(N, C, HW), block_elems,
                                vmem_budget, itemsize)
        else:
            out = _normalize_two_pass(x.reshape(N, C, HW), block_elems,
                                      vmem_budget, itemsize)
    return out.reshape(shape)


# --------------------------------------------------------------------------
if __name__ == "__main__":
    key = jax.random.PRNGKey(0)
    k1, k2, k3 = jax.random.split(key, 3)

    def ref_normalize(x, dim):
        norm = jnp.sqrt(jnp.sum(x * x, axis=dim, keepdims=True))
        return x / jnp.maximum(norm, _EPS)

    # 1) NCHW, dim=1 (channel) — main 3-D single-pass path (N and HW tiled).
    x1 = jax.random.normal(k1, (2, 4, 16, 16), dtype=jnp.float32)
    y1 = jax.block_until_ready(vector_norm(x1, dim=1, p=2))
    np.testing.assert_allclose(np.asarray(y1), np.asarray(ref_normalize(x1, 1)),
                               rtol=1e-5, atol=1e-6)
    norms = jnp.sqrt(jnp.sum(y1 * y1, axis=1))
    assert np.allclose(np.asarray(norms), 1.0, atol=1e-5)

    # 2) (B, D) embedding, dim=1 is the trailing axis — lane-dense 2-D path.
    x2 = jax.random.normal(k2, (8, 32), dtype=jnp.float32)
    y2 = jax.block_until_ready(vector_norm(x2, dim=1, p=2))
    np.testing.assert_allclose(np.asarray(y2), np.asarray(ref_normalize(x2, 1)),
                               rtol=1e-5, atol=1e-6)

    # 3) Exercise the large-C two-pass fallback at a small shape (forced,
    #    tiny block cap -> tiled + ragged C accumulation with masking).
    x3 = jax.random.normal(k3, (2, 20, 8, 8), dtype=jnp.float32)
    y3 = jax.block_until_ready(
        vector_norm(x3, dim=1, p=2, _force_two_pass=True, _max_block_elems=512))
    np.testing.assert_allclose(np.asarray(y3), np.asarray(ref_normalize(x3, 1)),
                               rtol=1e-5, atol=1e-6)

    print("KERNEL_OK")
</pallas_src>

<mosaic_0001>
module attributes {stable_mosaic.version = 11 : i64} {
  func.func @_l2norm_kernel_3d(%arg0: i32, %arg1: i32, %arg2: memref<1x4x256xf32, #tpu.memory_space<vmem>>, %arg3: memref<1x4x256xf32, #tpu.memory_space<vmem>>) attributes {dimension_semantics = [#tpu.dimension_semantics<parallel>, #tpu.dimension_semantics<parallel>], iteration_bounds = array<i64: 2, 1>, scalar_prefetch = 0 : i64, scratch_operands = 0 : i64, tpu.core_type = #tpu.core_type<tc>, window_params = [{transform_indices = @transform_0, window_bounds = array<i64: 1, 4, 256>}, {transform_indices = @transform_1, window_bounds = array<i64: 1, 4, 256>}]} {
    %c0 = arith.constant 0 : index
    %c0_0 = arith.constant 0 : index
    %c0_1 = arith.constant 0 : index
    %0 = vector.load %arg2[%c0, %c0_0, %c0_1] : memref<1x4x256xf32, #tpu.memory_space<vmem>>, vector<1x4x256xf32>
    %1 = arith.mulf %0, %0 : vector<1x4x256xf32>
    %cst = arith.constant dense<0.000000e+00> : vector<1x256xf32>
    %2 = vector.multi_reduction <add>, %1, %cst [1] : vector<1x4x256xf32> to vector<1x256xf32>
    %3 = vector.shape_cast %2 : vector<1x256xf32> to vector<1x1x256xf32>
    %cst_2 = arith.constant 1.000000e-24 : f32
    %4 = vector.broadcast %cst_2 : f32 to vector<1x1x256xf32>
    %5 = arith.maximumf %3, %4 : vector<1x1x256xf32>
    %6 = math.rsqrt %5 : vector<1x1x256xf32>
    %7 = vector.broadcast %6 : vector<1x1x256xf32> to vector<1x4x256xf32>
    %8 = arith.mulf %0, %7 : vector<1x4x256xf32>
    %c0_3 = arith.constant 0 : index
    %c0_4 = arith.constant 0 : index
    %c0_5 = arith.constant 0 : index
    %9 = vector.load %arg3[%c0_3, %c0_4, %c0_5] : memref<1x4x256xf32, #tpu.memory_space<vmem>>, vector<1x4x256xf32>
    tpu.vector_store %arg3[%c0_3, %c0_4, %c0_5], %8 {strides = array<i32>} : memref<1x4x256xf32, #tpu.memory_space<vmem>>, vector<1x4x256xf32>,
    return
  }
  func.func @transform_0(%arg0: i32, %arg1: i32) -> (i32, i32, i32) {
    %c0_i32 = arith.constant 0 : i32
    %c0_i32_0 = arith.constant 0 : i32
    return %arg0, %c0_i32, %arg1 : i32, i32, i32
  }
  func.func @transform_1(%arg0: i32, %arg1: i32) -> (i32, i32, i32) {
    %c0_i32 = arith.constant 0 : i32
    %c0_i32_0 = arith.constant 0 : i32
    return %arg0, %c0_i32, %arg1 : i32, i32, i32
  }
}

</mosaic_0001>

<llo_original>
// kernel: vector_norm.1
$region0: #{vector_norm.1}
  #allocation0 [shape = 'u32[]', space=smem, size = 0x4, offset = 0x4, fixed_abs, tag = 'smem constant byte address 0x4 - core index']
  #allocation1 [shape = 'u32[144,128]{1,0:T(1,128)}', space=vmem, size = 0x12000, scoped, tag = 'internal scratch']
  %s0 = inlined_call_operand.vmem [shape: f32[2,4,256], index: 0, kind: input, shape index: {}]
  %s1 = inlined_call_operand.vmem [shape: f32[2,4,256], index: 1, kind: output, shape index: {}]
  %s2 = sld [smem:[#allocation0]]
  $region37: #{vector_norm.1} parent=0
    _
  %s4 = ssub.s32 1, %s2
  %s5 = scalar_select 0, %s4, %s2
  loop: start=0, step=1, limit=4
  $region2: #{vector_norm.1} parent=0 // loop_pre_header
    _
  $region3: #{vector_norm.1} parent=0 // loop_header
    %s7 = sphi 0, %s11
    %p8 = scmp.ge.s32.totalorder %s7, 4
    %s14 = sphi 0, %s26
    %s15 = sphi 0, %s22
    %s16 = sphi 0, %s14
    %s17 = sphi 0, %s15
    %s18 = sphi 0, %s16
    %s19 = sphi 0, %s17
    %s31 = sphi 0, %s33
    %s34 = sphi 0, %s31
    %s35 = sphi 0, %s34
    %s51 = sphi 0, %s35
    %s59 = sphi 0, %s61
    %s62 = sphi 0, %s59
    %s63 = sphi 0, %s62
    %s79 = sphi 0, %s63
  $region4: #{vector_norm.1} parent=0 // loop_header_branch
    %10 = sbr.rel (%p8) target = $region8
  $region5: #{vector_norm.1} parent=0 // loop_body
    %s12 = ssub.s32 %s7, 1
    %s13 = ssub.s32 %s7, 2
    %s20 = sadd.s32 1, %s15
    %p21 = scmp.ge.s32.totalorder %s20, 1
    %s22 = scalar_select %p21, 0, %s20
    %s23 = sadd.s32 1, %s14
    %s24 = scalar_select %p21, %s23, %s14
    %p25 = scmp.ge.s32.totalorder %s24, 2
    %s26 = scalar_select %p25, 0, %s24
    %s27 = ssub.s32 %s14, %s26
    %s28 = ssub.s32 %s15, %s22
    %s29 = sor.u32 %s27, %s28
    %p30 = scmp.eq.s32.totalorder %s29, 0
    %s32 = sadd.s32 %s31, 1
    %s33 = scalar_select %p30, %s31, %s32
    %p36 = pneg %p30
    %p37 = scmp.eq.s32.totalorder %s7, 1
    %p38 = por %p36, %p37
    %p39 = scmp.ne.s32.totalorder %s31, %s34
    %p40 = scmp.eq.s32.totalorder %s7, 0
    %p41 = por %p39, %p40
    %p42 = scmp.ne.s32.totalorder %s31, %s34
    %p43 = scmp.eq.s32.totalorder %s12, 1
    %p44 = por %p42, %p43
    %p45 = scmp.ne.s32.totalorder %s34, %s35
    %p46 = scmp.eq.s32.totalorder %s12, 0
    %p47 = por %p45, %p46
    %p48 = scmp.ne.s32.totalorder %s34, %s35
    %p49 = scmp.eq.s32.totalorder %s13, 1
    %p50 = por %p48, %p49
    %p52 = scmp.ne.s32.totalorder %s35, %s51
    %p53 = scmp.eq.s32.totalorder %s13, 0
    %p54 = por %p52, %p53
    %s55 = ssub.s32 %s14, %s26
    %s56 = ssub.s32 %s15, %s22
    %s57 = sor.u32 %s55, %s56
    %p58 = scmp.eq.s32.totalorder %s57, 0
    %s60 = sadd.s32 %s59, 1
    %s61 = scalar_select %p58, %s59, %s60
    %p64 = pneg %p58
    %p65 = scmp.eq.s32.totalorder %s7, 1
    %p66 = por %p64, %p65
    %p67 = scmp.ne.s32.totalorder %s59, %s62
    %p68 = scmp.eq.s32.totalorder %s7, 0
    %p69 = por %p67, %p68
    %p70 = scmp.ne.s32.totalorder %s59, %s62
    %p71 = scmp.eq.s32.totalorder %s12, 1
    %p72 = por %p70, %p71
    %p73 = scmp.ne.s32.totalorder %s62, %s63
    %p74 = scmp.eq.s32.totalorder %s12, 0
    %p75 = por %p73, %p74
    %p76 = scmp.ne.s32.totalorder %s62, %s63
    %p77 = scmp.eq.s32.totalorder %s13, 1
    %p78 = por %p76, %p77
    %p80 = scmp.ne.s32.totalorder %s63, %s79
    %p81 = scmp.eq.s32.totalorder %s13, 0
    %p82 = por %p80, %p81
    %p83 = scmp.le.s32.totalorder 1, %s7
    %p84 = scmp.lt.s32.totalorder %s7, 3
    %p85 = pnand %p83, %p84
    %p86 = pneg %p85
    // Predicated region
    $region9: #{vector_norm.1} parent=5 // pred_check
      _
    $region10: #{vector_norm.1} parent=5 // pred_check_branch
      %88 = sbr.rel (%p85) target = $region12
    $region11: #{vector_norm.1} parent=5 // pred_region
      %s89 = ssub.s32 %s7, 1
    $region12: #{vector_norm.1} parent=5 // pred_fallthru
      _
    %p90 = scmp.lt.s32.totalorder %s7, 2
    // Predicated region
    $region13: #{vector_norm.1} parent=5 // pred_check
      %p91 = pneg %p90
    $region14: #{vector_norm.1} parent=5 // pred_check_branch
      %93 = sbr.rel (%p91) target = $region16
    $region15: #{vector_norm.1} parent=5 // pred_region
      // Predicated region
      $region17: #{vector_norm.1} parent=15 // pred_check
        %p94 = pneg %p41
      $region18: #{vector_norm.1} parent=15 // pred_check_branch
        %96 = sbr.rel (%p94) target = $region20
      $region19: #{vector_norm.1} parent=15 // pred_region
        %s97 = smul.u32 2, %s15
        %p98 = scmp.lt.s32.totalorder %s14, 1
        %s99 = scalar_select %p98, %s14, 1
        %p100 = scmp.lt.s32.totalorder %s97, 1
        %s101 = scalar_select %p100, %s97, 1
        %s102 = smul.addr %s99, 2
        %s103 = sadd.s32 %s101, %s102
        %s104 = smul.addr %s103, 4
        %s105 = scalar_lea.vmem %s0, %s104
        %s106 = smul.u32 2, %s15
      $region20: #{vector_norm.1} parent=15 // pred_fallthru
        _
    $region16: #{vector_norm.1} parent=5 // pred_fallthru
      _
    %p107 = scmp.le.s32.totalorder 1, %s7
    %p108 = scmp.lt.s32.totalorder %s7, 3
    %p109 = pnand %p107, %p108
    %p110 = pneg %p109
    // Predicated region
    $region21: #{vector_norm.1} parent=5 // pred_check
      _
    $region22: #{vector_norm.1} parent=5 // pred_check_branch
      %112 = sbr.rel (%p109) target = $region24
    $region23: #{vector_norm.1} parent=5 // pred_region
      %s113 = ssub.s32 %s7, 1
      %s114 = smul.u32 2, %s17
      %p115 = scmp.lt.s32.totalorder %s16, 1
      %s116 = scalar_select %p115, %s16, 1
      %p117 = scmp.lt.s32.totalorder %s114, 1
      %s118 = scalar_select %p117, %s114, 1
      %s119 = smul.addr %s116, 2
      %s120 = sadd.s32 %s118, %s119
      %s121 = smul.addr %s120, 4
      %s122 = scalar_lea.vmem %s0, %s121
      %p123 = pneg %p47
      %p124 = pneg %p44
      %p125 = pneg %p75
      %p126 = pneg %p72
      %s127 = smul.u32 2, %s17
      %p128 = scmp.lt.s32.totalorder %s16, 1
      %s129 = scalar_select %p128, %s16, 1
      %p130 = scmp.lt.s32.totalorder %s127, 1
      %s131 = scalar_select %p130, %s127, 1
      %s132 = smul.addr %s129, 2
      %s133 = sadd.s32 %s131, %s132
      %s134 = smul.addr %s133, 4
      %s135 = scalar_lea.vmem %s1, %s134
      %s136 = smul.u32 2, %s17
      %p137 = scmp.lt.s32.totalorder %s16, 1
      %s138 = scalar_select %p137, %s16, 1
      %p139 = scmp.lt.s32.totalorder %s136, 1
      %s140 = scalar_select %p139, %s136, 1
      %s141 = smul.addr %s138, 2
      %s142 = sadd.s32 %s140, %s141
      %s143 = smul.addr %s142, 4
      %s144 = scalar_lea.vmem %s0, %s143
      %s145 = smul.u32 2, %s17
      %s146 = smul.u32 2, %s17
      %p147 = scmp.lt.s32.totalorder %s16, 1
      %s148 = scalar_select %p147, %s16, 1
      %p149 = scmp.lt.s32.totalorder %s146, 1
      %s150 = scalar_select %p149, %s146, 1
      %s151 = smul.addr %s148, 2
      %s152 = sadd.s32 %s150, %s151
      %s153 = smul.addr %s152, 4
      %s154 = scalar_lea.vmem %s1, %s153
      %s155 = smul.u32 2, %s17
      %v156 = vld [vmem:[%s144] sm:$0xff]
      %v157 = vmul.f32 %v156, %v156
      %v159 = vcombine.high %v157, %v157
      %vm161 = vcmask 1043456
      %v162 = vsel %vm161, %v157, 0.0
      %v163 = vrot.slane %v162, 4
      %v164 = vadd.f32 %v162, %v163
      %v165 = vrot.slane %v164, 2
      %v166 = vadd.f32 %v164, %v165
      %v167 = vrot.slane %v166, 1
      %v168 = vadd.f32 %v166, %v167
      %v169 = vsel %vm161, %v159, 0.0
      %v170 = vrot.slane %v169, 4
      %v171 = vadd.f32 %v169, %v170
      %v172 = vrot.slane %v171, 2
      %v173 = vadd.f32 %v171, %v172
      %v174 = vrot.slane %v173, 1
      %v175 = vadd.f32 %v173, %v174
      %v176 = vmax.f32 %v168, 1e-24
      %v177 = vmax.f32 %v175, 1e-24
      %v178 = vrsqrt.pop %v176
      %v179 = vrsqrt.pop %v177
      %v182 = vcombine.low %v178, %v179
      %v184 = vmul.f32 %v156, %v182
      %185 = vst [vmem:[%s154] sm:$0xff] %v184
      %s186 = smul.u32 2, %s17
      %p187 = scmp.lt.s32.totalorder %s16, 1
      %s188 = scalar_select %p187, %s16, 1
      %p189 = scmp.lt.s32.totalorder %s186, 1
      %s190 = scalar_select %p189, %s186, 1
      %s191 = smul.addr %s188, 2
      %s192 = sadd.s32 %s190, %s191
      %s193 = smul.addr %s192, 4
      %s194 = scalar_lea.vmem %s1, %s193
      // Predicated region
      $region25: #{vector_norm.1} parent=23 // pred_check
        %p195 = pneg %p72
      $region26: #{vector_norm.1} parent=23 // pred_check_branch
        %197 = sbr.rel (%p195) target = $region28
      $region27: #{vector_norm.1} parent=23 // pred_region
        %s198 = smul.u32 2, %s17
      $region28: #{vector_norm.1} parent=23 // pred_fallthru
        _
    $region24: #{vector_norm.1} parent=5 // pred_fallthru
      _
    %p199 = scmp.le.s32.totalorder 2, %s7
    // Predicated region
    $region29: #{vector_norm.1} parent=5 // pred_check
      %p200 = pneg %p199
    $region30: #{vector_norm.1} parent=5 // pred_check_branch
      %202 = sbr.rel (%p200) target = $region32
    $region31: #{vector_norm.1} parent=5 // pred_region
      %s203 = ssub.s32 %s7, 2
      // Predicated region
      $region33: #{vector_norm.1} parent=31 // pred_check
        %p204 = pneg %p78
      $region34: #{vector_norm.1} parent=31 // pred_check_branch
        %206 = sbr.rel (%p204) target = $region36
      $region35: #{vector_norm.1} parent=31 // pred_region
        %s207 = smul.u32 2, %s19
        %p208 = scmp.lt.s32.totalorder %s18, 1
        %s209 = scalar_select %p208, %s18, 1
        %p210 = scmp.lt.s32.totalorder %s207, 1
        %s211 = scalar_select %p210, %s207, 1
        %s212 = smul.addr %s209, 2
        %s213 = sadd.s32 %s211, %s212
        %s214 = smul.addr %s213, 4
        %s215 = scalar_lea.vmem %s1, %s214
      $region36: #{vector_norm.1} parent=31 // pred_fallthru
        _
    $region32: #{vector_norm.1} parent=5 // pred_fallthru
      _
  $region6: #{vector_norm.1} parent=0 // loop_footer
    %s11 = sadd.s32 1, %s7
  $region7: #{vector_norm.1} parent=0 // loop_footer_branch
    %6 = sbr.rel target = $region3
  $region8: #{vector_norm.1} parent=0 // loop_exit
    _

</llo_original>
